<compile_context>
chip_gen: v6e
topology: v6e:2x2x1
jax: 0.10.0
libtpu: 0.0.40
codegen_flags: <defaults>
</compile_context>

<pallas_src>
import functools

import jax
import jax.numpy as jnp
from jax.experimental import pallas as pl
from jax.experimental.pallas import tpu as pltpu

EPS = 1e-5  # PyTorch BatchNorm default eps


def ca_kernel(x_ref, w1_ref, b1_ref, w2_ref, b2_ref, o_ref, *, hw_true, chunk):
    """One batch element per grid step.

    x_ref, o_ref : (C, HW_pad)  -- channels on sublanes, spatial on lanes.
    w1_ref: (mid, C), b1_ref: (mid, 1)   (BN1 folded into FC1)
    w2_ref: (C, mid), b2_ref: (C, 1)     (BN2 folded into FC2)
    """
    C, hw_pad = x_ref.shape
    n_chunks = hw_pad // chunk
    need_mask = hw_pad != hw_true           # static (shapes are static)
    neg = jnp.finfo(jnp.float32).min

    # ---- Pass 1: fused sum + max pooling over the spatial (lane) axis,
    # chunk by chunk so the full (C, HW) tile is never live in vregs. ----
    def pool_body(i, carry):
        s_acc, m_acc = carry
        start = pl.multiple_of(i * chunk, chunk)
        xc = x_ref[:, pl.ds(start, chunk)].astype(jnp.float32)      # (C, chunk)
        if need_mask:
            pos = i * chunk + jax.lax.broadcasted_iota(jnp.int32, (C, chunk), 1)
            xm = jnp.where(pos < hw_true, xc, neg)                  # mask pad lanes for max
        else:
            xm = xc
        s_acc = s_acc + jnp.sum(xc, axis=-1, keepdims=True)         # pad lanes are 0 -> sum ok
        m_acc = jnp.maximum(m_acc, jnp.max(xm, axis=-1, keepdims=True))
        return s_acc, m_acc

    s0 = jnp.zeros((C, 1), jnp.float32)
    m0 = jnp.full((C, 1), neg, jnp.float32)
    s_acc, m_acc = jax.lax.fori_loop(0, n_chunks, pool_body, (s0, m0), unroll=True)

    gap = s_acc * (1.0 / hw_true)                                   # (C, 1)
    gmp = m_acc                                                     # (C, 1)

    # ---- Squeeze MLP (tiny; column orientation so no transposes are needed
    # and the result broadcasts directly over the lane axis).  BN is
    # pre-folded; the two branches share FC2 via linearity:
    #   fc2(a) + fc2(b) == W2 @ (a + b) + 2*b2. ----
    w1 = w1_ref[...]
    b1 = b1_ref[...]
    a = jnp.maximum(jnp.dot(w1, gap, preferred_element_type=jnp.float32) + b1, 0.0)
    b = jnp.maximum(jnp.dot(w1, gmp, preferred_element_type=jnp.float32) + b1, 0.0)
    z = jnp.dot(w2_ref[...], a + b, preferred_element_type=jnp.float32) + 2.0 * b2_ref[...]
    scale = jax.nn.sigmoid(z)                                       # (C, 1)

    # ---- Pass 2: re-read x chunk-by-chunk, scale, store (lane-dense vst). ----
    def scale_body(i, carry):
        start = pl.multiple_of(i * chunk, chunk)
        xc = x_ref[:, pl.ds(start, chunk)].astype(jnp.float32)
        o_ref[:, pl.ds(start, chunk)] = (xc * scale).astype(o_ref.dtype)
        return carry

    jax.lax.fori_loop(0, n_chunks, scale_body, 0, unroll=True)


def _fold_bn_into_fc(params):
    """Fold inference-mode BN1/BN2 into the FC weights (column orientation)."""
    f32 = jnp.float32
    s1 = params["bn1_g"] * jax.lax.rsqrt(params["bn1_v"] + EPS)      # (C,)
    t1 = params["bn1_b"] - params["bn1_m"] * s1                      # (C,)
    s2 = params["bn2_g"] * jax.lax.rsqrt(params["bn2_v"] + EPS)      # (mid,)
    t2 = params["bn2_b"] - params["bn2_m"] * s2                      # (mid,)
    w1 = params["fc1_w"]                                             # (mid, C)
    w2 = params["fc2_w"]                                             # (C, mid)
    w1e = (w1 * s1[None, :]).astype(f32)                             # (mid, C)
    b1e = (params["fc1_b"] + w1 @ t1)[:, None].astype(f32)           # (mid, 1)
    w2e = (w2 * s2[None, :]).astype(f32)                             # (C, mid)
    b2e = (params["fc2_b"] + w2 @ t2)[:, None].astype(f32)           # (C, 1)
    return w1e, b1e, w2e, b2e


def ca_module_forward(x, params):
    """x: (N, C, H, W) float32.  Channel-attention forward as one Pallas call."""
    N, C, H, W = x.shape
    hw = H * W
    hw_pad = ((hw + 127) // 128) * 128       # lane-dense last dim -> unmasked vst
    x2 = x.reshape(N, C, hw)
    if hw_pad != hw:
        x2 = jnp.pad(x2, ((0, 0), (0, 0), (0, hw_pad - hw)))  # zero pad (sum-safe)

    # In-kernel sweep chunk: multiple of 128 dividing hw_pad, capped so one
    # f32 (C, chunk) chunk stays well inside the 64 x 4KiB vreg file.
    chunk = 128
    for c in (256, 512, 1024):
        if hw_pad % c == 0 and C * c * 4 <= 128 * 1024:
            chunk = c

    w1e, b1e, w2e, b2e = _fold_bn_into_fc(params)
    kernel = functools.partial(ca_kernel, hw_true=hw, chunk=chunk)

    # Grid over the batch: one (C, hw_pad) block per step (auto double-buffered
    # DMA/compute overlap); the folded params use constant index maps so they
    # stay VMEM-resident across steps.
    # TODO(synk): for very large C*H*W (per-step block >> 8 MiB) additionally
    # tile the spatial axis with a two-pass (pool, then scale) kernel to fit
    # v7x's smaller VMEM.
    grid_spec = pltpu.PrefetchScalarGridSpec(
        num_scalar_prefetch=0,
        grid=(N,),
        in_specs=[
            pl.BlockSpec((None, C, hw_pad), lambda n: (n, 0, 0)),   # x: batch squeezed
            pl.BlockSpec(w1e.shape, lambda n: (0, 0)),
            pl.BlockSpec(b1e.shape, lambda n: (0, 0)),
            pl.BlockSpec(w2e.shape, lambda n: (0, 0)),
            pl.BlockSpec(b2e.shape, lambda n: (0, 0)),
        ],
        out_specs=pl.BlockSpec((None, C, hw_pad), lambda n: (n, 0, 0)),
    )
    out = pl.pallas_call(
        kernel,
        out_shape=jax.ShapeDtypeStruct((N, C, hw_pad), x.dtype),
        grid_spec=grid_spec,
        compiler_params=pltpu.CompilerParams(
            dimension_semantics=("parallel",),   # batch steps independent (v7x: 2 TCs)
        ),
    )(x2, w1e, b1e, w2e, b2e)

    return out[:, :, :hw].reshape(N, C, H, W)


def ca_module_reference(x, params):
    """Pure-JAX reference (unfused BN) for validation."""
    gap = jnp.mean(x, axis=(2, 3))           # (N, C)
    gmp = jnp.max(x, axis=(2, 3))            # (N, C)

    def bn(v, g, b, m, var):
        return (v - m) * jax.lax.rsqrt(var + EPS) * g + b

    def branch(v):
        v = bn(v, params["bn1_g"], params["bn1_b"], params["bn1_m"], params["bn1_v"])
        v = v @ params["fc1_w"].T + params["fc1_b"]
        v = jnp.maximum(v, 0.0)
        v = bn(v, params["bn2_g"], params["bn2_b"], params["bn2_m"], params["bn2_v"])
        v = v @ params["fc2_w"].T + params["fc2_b"]
        return v

    scale = jax.nn.sigmoid(branch(gap) + branch(gmp))
    return x * scale[:, :, None, None]


def make_params(key, num_channels, reduction):
    mid = num_channels // reduction
    keys = jax.random.split(key, 12)
    f = jnp.float32
    return {
        # PyTorch layouts: Linear.weight is (out, in); BN params are 1-D.
        "fc1_w": (jax.random.normal(keys[0], (mid, num_channels)) * 0.1).astype(f),
        "fc1_b": (jax.random.normal(keys[1], (mid,)) * 0.1).astype(f),
        "fc2_w": (jax.random.normal(keys[2], (num_channels, mid)) * 0.1).astype(f),
        "fc2_b": (jax.random.normal(keys[3], (num_channels,)) * 0.1).astype(f),
        "bn1_g": (1.0 + 0.1 * jax.random.normal(keys[4], (num_channels,))).astype(f),
        "bn1_b": (0.1 * jax.random.normal(keys[5], (num_channels,))).astype(f),
        "bn1_m": (0.1 * jax.random.normal(keys[6], (num_channels,))).astype(f),
        "bn1_v": jax.random.uniform(keys[7], (num_channels,), minval=0.5, maxval=1.5).astype(f),
        "bn2_g": (1.0 + 0.1 * jax.random.normal(keys[8], (mid,))).astype(f),
        "bn2_b": (0.1 * jax.random.normal(keys[9], (mid,))).astype(f),
        "bn2_m": (0.1 * jax.random.normal(keys[10], (mid,))).astype(f),
        "bn2_v": jax.random.uniform(keys[11], (mid,), minval=0.5, maxval=1.5).astype(f),
    }


if __name__ == "__main__":
    key = jax.random.PRNGKey(0)
    k_x, k_p = jax.random.split(key)

    N, C, H, W = 2, 64, 16, 16     # num_channels=64, reduction=16 -> mid=4
    reduction = 16

    x = jax.random.normal(k_x, (N, C, H, W), dtype=jnp.float32)
    params = make_params(k_p, C, reduction)

    y = jax.block_until_ready(ca_module_forward(x, params))
    y_ref = jax.block_until_ready(ca_module_reference(x, params))

    assert y.shape == (N, C, H, W)
    assert jnp.allclose(y, y_ref, rtol=1e-4, atol=1e-4), "mismatch vs JAX reference"

    print("KERNEL_OK")
</pallas_src>

<mosaic_0001>
module attributes {stable_mosaic.version = 11 : i64} {
  func.func @ca_kernel(%arg0: i32, %arg1: memref<1x64x256xf32, #tpu.memory_space<vmem>>, %arg2: memref<4x64xf32, #tpu.memory_space<vmem>>, %arg3: memref<4x1xf32, #tpu.memory_space<vmem>>, %arg4: memref<64x4xf32, #tpu.memory_space<vmem>>, %arg5: memref<64x1xf32, #tpu.memory_space<vmem>>, %arg6: memref<1x64x256xf32, #tpu.memory_space<vmem>>) attributes {dimension_semantics = [#tpu.dimension_semantics<parallel>], iteration_bounds = array<i64: 2>, scalar_prefetch = 0 : i64, scratch_operands = 0 : i64, tpu.core_type = #tpu.core_type<tc>, window_params = [{transform_indices = @transform_0, window_bounds = array<i64: 1, 64, 256>}, {pipeline_mode = #tpu.pipeline_mode<synchronous>, transform_indices = @transform_1, window_bounds = array<i64: 4, 64>}, {pipeline_mode = #tpu.pipeline_mode<synchronous>, transform_indices = @transform_2, window_bounds = array<i64: 4, 1>}, {pipeline_mode = #tpu.pipeline_mode<synchronous>, transform_indices = @transform_3, window_bounds = array<i64: 64, 4>}, {pipeline_mode = #tpu.pipeline_mode<synchronous>, transform_indices = @transform_4, window_bounds = array<i64: 64, 1>}, {transform_indices = @transform_5, window_bounds = array<i64: 1, 64, 256>}]} {
    %cst = arith.constant 0.000000e+00 : f32
    %0 = vector.broadcast %cst : f32 to vector<64x1xf32>
    %cst_0 = arith.constant -3.40282347E+38 : f32
    %1 = vector.broadcast %cst_0 : f32 to vector<64x1xf32>
    %c0_i32 = arith.constant 0 : i32
    %c256_i32 = arith.constant 256 : i32
    %2 = arith.muli %c0_i32, %c256_i32 : i32
    %3 = tpu.assume_multiple %2, 256 : i32
    %c0 = arith.constant 0 : index
    %c0_1 = arith.constant 0 : index
    %4 = arith.index_cast %3 : i32 to index
    %5 = vector.load %arg1[%c0, %c0_1, %4] : memref<1x64x256xf32, #tpu.memory_space<vmem>>, vector<1x64x256xf32>
    %6 = vector.shape_cast %5 : vector<1x64x256xf32> to vector<64x256xf32>
    %cst_2 = arith.constant dense<0.000000e+00> : vector<64xf32>
    %7 = vector.multi_reduction <add>, %6, %cst_2 [1] : vector<64x256xf32> to vector<64xf32>
    %8 = vector.shape_cast %7 : vector<64xf32> to vector<64x1xf32>
    %9 = arith.addf %0, %8 : vector<64x1xf32>
    %cst_3 = arith.constant dense<0xFF800000> : vector<64xf32>
    %10 = vector.multi_reduction <maximumf>, %6, %cst_3 [1] : vector<64x256xf32> to vector<64xf32>
    %11 = vector.shape_cast %10 : vector<64xf32> to vector<64x1xf32>
    %12 = arith.maximumf %1, %11 : vector<64x1xf32>
    %c1_i32 = arith.constant 1 : i32
    %cst_4 = arith.constant 3.906250e-03 : f32
    %13 = vector.broadcast %cst_4 : f32 to vector<64x1xf32>
    %14 = arith.mulf %9, %13 : vector<64x1xf32>
    %c0_5 = arith.constant 0 : index
    %c0_6 = arith.constant 0 : index
    %15 = vector.load %arg2[%c0_5, %c0_6] : memref<4x64xf32, #tpu.memory_space<vmem>>, vector<4x64xf32>
    %c0_7 = arith.constant 0 : index
    %c0_8 = arith.constant 0 : index
    %16 = vector.load %arg3[%c0_7, %c0_8] : memref<4x1xf32, #tpu.memory_space<vmem>>, vector<4x1xf32>
    %cst_9 = arith.constant dense<0.000000e+00> : vector<4x1xf32>
    %17 = tpu.matmul %15, %14, %cst_9 {dimension_numbers = #tpu.dot_dimension_numbers<[1], [0], [0], [1], [0, 0, 1, 1], [], []>} : vector<4x64xf32>, vector<64x1xf32>, vector<4x1xf32> -> vector<4x1xf32>
    %18 = arith.addf %17, %16 : vector<4x1xf32>
    %cst_10 = arith.constant 0.000000e+00 : f32
    %19 = vector.broadcast %cst_10 : f32 to vector<4x1xf32>
    %20 = arith.maximumf %18, %19 : vector<4x1xf32>
    %cst_11 = arith.constant dense<0.000000e+00> : vector<4x1xf32>
    %21 = tpu.matmul %15, %12, %cst_11 {dimension_numbers = #tpu.dot_dimension_numbers<[1], [0], [0], [1], [0, 0, 1, 1], [], []>} : vector<4x64xf32>, vector<64x1xf32>, vector<4x1xf32> -> vector<4x1xf32>
    %22 = arith.addf %21, %16 : vector<4x1xf32>
    %cst_12 = arith.constant 0.000000e+00 : f32
    %23 = vector.broadcast %cst_12 : f32 to vector<4x1xf32>
    %24 = arith.maximumf %22, %23 : vector<4x1xf32>
    %c0_13 = arith.constant 0 : index
    %c0_14 = arith.constant 0 : index
    %25 = vector.load %arg4[%c0_13, %c0_14] : memref<64x4xf32, #tpu.memory_space<vmem>>, vector<64x4xf32>
    %26 = arith.addf %20, %24 : vector<4x1xf32>
    %cst_15 = arith.constant dense<0.000000e+00> : vector<64x1xf32>
    %27 = tpu.matmul %25, %26, %cst_15 {dimension_numbers = #tpu.dot_dimension_numbers<[1], [0], [0], [1], [0, 0, 1, 1], [], []>} : vector<64x4xf32>, vector<4x1xf32>, vector<64x1xf32> -> vector<64x1xf32>
    %c0_16 = arith.constant 0 : index
    %c0_17 = arith.constant 0 : index
    %28 = vector.load %arg5[%c0_16, %c0_17] : memref<64x1xf32, #tpu.memory_space<vmem>>, vector<64x1xf32>
    %cst_18 = arith.constant 2.000000e+00 : f32
    %29 = vector.broadcast %cst_18 : f32 to vector<64x1xf32>
    %30 = arith.mulf %29, %28 : vector<64x1xf32>
    %31 = arith.addf %27, %30 : vector<64x1xf32>
    %32 = arith.negf %31 : vector<64x1xf32>
    %33 = math.exp %32 : vector<64x1xf32>
    %cst_19 = arith.constant 1.000000e+00 : f32
    %34 = vector.broadcast %cst_19 : f32 to vector<64x1xf32>
    %35 = arith.addf %34, %33 : vector<64x1xf32>
    %36 = arith.divf %34, %35 : vector<64x1xf32>
    %c0_i32_20 = arith.constant 0 : i32
    %c256_i32_21 = arith.constant 256 : i32
    %37 = arith.muli %c0_i32_20, %c256_i32_21 : i32
    %38 = tpu.assume_multiple %37, 256 : i32
    %c0_22 = arith.constant 0 : index
    %c0_23 = arith.constant 0 : index
    %39 = arith.index_cast %38 : i32 to index
    %40 = vector.load %arg1[%c0_22, %c0_23, %39] : memref<1x64x256xf32, #tpu.memory_space<vmem>>, vector<1x64x256xf32>
    %41 = vector.shape_cast %40 : vector<1x64x256xf32> to vector<64x256xf32>
    %42 = vector.broadcast %36 : vector<64x1xf32> to vector<64x256xf32>
    %43 = arith.mulf %41, %42 : vector<64x256xf32>
    %c0_24 = arith.constant 0 : index
    %c0_25 = arith.constant 0 : index
    %44 = arith.index_cast %38 : i32 to index
    %45 = vector.load %arg6[%c0_24, %c0_25, %44] : memref<1x64x256xf32, #tpu.memory_space<vmem>>, vector<1x64x256xf32>
    %46 = vector.shape_cast %45 : vector<1x64x256xf32> to vector<64x256xf32>
    %47 = vector.shape_cast %43 : vector<64x256xf32> to vector<1x64x256xf32>
    tpu.vector_store %arg6[%c0_24, %c0_25, %44], %47 {strides = array<i32>} : memref<1x64x256xf32, #tpu.memory_space<vmem>>, vector<1x64x256xf32>,
    %c1_i32_26 = arith.constant 1 : i32
    return
  }
  func.func @transform_0(%arg0: i32) -> (i32, i32, i32) {
    %c0_i32 = arith.constant 0 : i32
    %c0_i32_0 = arith.constant 0 : i32
    %c0_i32_1 = arith.constant 0 : i32
    return %arg0, %c0_i32, %c0_i32_0 : i32, i32, i32
  }
  func.func @transform_1(%arg0: i32) -> (i32, i32) {
    %c0_i32 = arith.constant 0 : i32
    %c0_i32_0 = arith.constant 0 : i32
    %c0_i32_1 = arith.constant 0 : i32
    return %c0_i32, %c0_i32_0 : i32, i32
  }
  func.func @transform_2(%arg0: i32) -> (i32, i32) {
    %c0_i32 = arith.constant 0 : i32
    %c0_i32_0 = arith.constant 0 : i32
    %c0_i32_1 = arith.constant 0 : i32
    return %c0_i32, %c0_i32_0 : i32, i32
  }
  func.func @transform_3(%arg0: i32) -> (i32, i32) {
    %c0_i32 = arith.constant 0 : i32
    %c0_i32_0 = arith.constant 0 : i32
    %c0_i32_1 = arith.constant 0 : i32
    return %c0_i32, %c0_i32_0 : i32, i32
  }
  func.func @transform_4(%arg0: i32) -> (i32, i32) {
    %c0_i32 = arith.constant 0 : i32
    %c0_i32_0 = arith.constant 0 : i32
    %c0_i32_1 = arith.constant 0 : i32
    return %c0_i32, %c0_i32_0 : i32, i32
  }
  func.func @transform_5(%arg0: i32) -> (i32, i32, i32) {
    %c0_i32 = arith.constant 0 : i32
    %c0_i32_0 = arith.constant 0 : i32
    %c0_i32_1 = arith.constant 0 : i32
    return %arg0, %c0_i32, %c0_i32_0 : i32, i32, i32
  }
}

</mosaic_0001>

<llo_original>
// kernel: tpu_custom_call.1
$region0: #{tpu_custom_call.1}
  #allocation0 [shape = 'u32[]', space=smem, size = 0x4, offset = 0x4, fixed_abs, tag = 'smem constant byte address 0x4 - core index']
  #allocation1 [shape = 'u32[144,128]{1,0:T(1,128)}', space=vmem, size = 0x12000, scoped, tag = 'internal scratch']
  %s0 = inlined_call_operand.hbm [shape: f32[2,64,256], index: 0, kind: input, shape index: {}]
  %s1 = inlined_call_operand.vmem [shape: f32[4,64], index: 1, kind: input, shape index: {}]
  %s2 = inlined_call_operand.vmem [shape: f32[4,1], index: 2, kind: input, shape index: {}]
  %s3 = inlined_call_operand.vmem [shape: f32[64,4], index: 3, kind: input, shape index: {}]
  %s4 = inlined_call_operand.vmem [shape: f32[64,1], index: 4, kind: input, shape index: {}]
  %s5 = inlined_call_operand.hbm [shape: f32[2,64,256], index: 5, kind: output, shape index: {}]
  %s6 = sld [smem:[#allocation0]]
  $region57: #{tpu_custom_call.1} parent=0
    _
  %s8 = ssub.s32 1, %s6
  %s9 = scalar_select 0, %s8, %s6
  $region1: #{tpu_custom_call.1} parent=0
    #allocation2 [shape = 'u8[131072]{0}', space=vmem, size = 0x20000, scoped, tag = 'input window, operand 0']
    #allocation3 [shape = 's32[2]{0}', space=sflag, size = 0x8, scoped, tag = 'scoped memory for tpu_custom_call.1']
    #allocation4 [shape = 's32[2]{0}', space=sflag, size = 0x8, scoped, tag = 'scoped memory for tpu_custom_call.1']
    #allocation5 [shape = 'u8[131072]{0}', space=vmem, size = 0x20000, scoped, tag = 'output window, operand 0']
    %10 = vsyncpa [#allocation3], 0
    %s11 = scalar_lea.sflag [#allocation3], 1
    %12 = vsyncpa %s11, 0
    %13 = vsyncpa [#allocation4], 0
    %s14 = scalar_lea.sflag [#allocation4], 1
    %15 = vsyncpa %s14, 0
    loop: start=0, step=1, limit=4
    $region2: #{tpu_custom_call.1} parent=1 // loop_pre_header
      _
    $region3: #{tpu_custom_call.1} parent=1 // loop_header
      %s17 = sphi 0, %s21
      %p18 = scmp.ge.s32.totalorder %s17, 4
      %s27 = sphi 0, %s29
      %s30 = sphi 0, %s27
      %s31 = sphi 0, %s30
      %s47 = sphi 0, %s31
      %s51 = sphi 0, %s51
      %s53 = sphi 0, %s51
      %s54 = sphi 0, %s53
      %s68 = sphi 0, %s54
      %s72 = sphi 0, %s72
      %s74 = sphi 0, %s72
      %s75 = sphi 0, %s74
      %s89 = sphi 0, %s75
      %s93 = sphi 0, %s93
      %s95 = sphi 0, %s93
      %s96 = sphi 0, %s95
      %s110 = sphi 0, %s96
      %s114 = sphi 0, %s114
      %s116 = sphi 0, %s114
      %s117 = sphi 0, %s116
      %s131 = sphi 0, %s117
      %s137 = sphi 0, %s139
      %s140 = sphi 0, %s137
      %s141 = sphi 0, %s140
      %s157 = sphi 0, %s141
    $region4: #{tpu_custom_call.1} parent=1 // loop_header_branch
      %20 = sbr.rel (%p18) target = $region8
    $region5: #{tpu_custom_call.1} parent=1 // loop_body
      %s22 = ssub.s32 %s17, 1
      %s23 = ssub.s32 %s17, 2
      %s24 = sadd.s32 %s17, 1
      %s25 = ssub.s32 %s17, %s24
      %p26 = scmp.eq.s32.totalorder %s25, 0
      %s28 = sadd.s32 %s27, 1
      %s29 = scalar_select %p26, %s27, %s28
      %p32 = pneg %p26
      %p33 = scmp.eq.s32.totalorder %s17, 1
      %p34 = por %p32, %p33
      %p35 = scmp.ne.s32.totalorder %s27, %s30
      %p36 = scmp.eq.s32.totalorder %s17, 0
      %p37 = por %p35, %p36
      %p38 = scmp.ne.s32.totalorder %s27, %s30
      %p39 = scmp.eq.s32.totalorder %s22, 1
      %p40 = por %p38, %p39
      %p41 = scmp.ne.s32.totalorder %s30, %s31
      %p42 = scmp.eq.s32.totalorder %s22, 0
      %p43 = por %p41, %p42
      %p44 = scmp.ne.s32.totalorder %s30, %s31
      %p45 = scmp.eq.s32.totalorder %s23, 1
      %p46 = por %p44, %p45
      %p48 = scmp.ne.s32.totalorder %s31, %s47
      %p49 = scmp.eq.s32.totalorder %s23, 0
      %p50 = por %p48, %p49
      %s52 = sadd.s32 %s51, 1
      %p55 = scmp.eq.s32.totalorder %s17, 1
      %p56 = scmp.ne.s32.totalorder %s51, %s53
      %p57 = scmp.eq.s32.totalorder %s17, 0
      %p58 = por %p56, %p57
      %p59 = scmp.ne.s32.totalorder %s51, %s53
      %p60 = scmp.eq.s32.totalorder %s22, 1
      %p61 = por %p59, %p60
      %p62 = scmp.ne.s32.totalorder %s53, %s54
      %p63 = scmp.eq.s32.totalorder %s22, 0
      %p64 = por %p62, %p63
      %p65 = scmp.ne.s32.totalorder %s53, %s54
      %p66 = scmp.eq.s32.totalorder %s23, 1
      %p67 = por %p65, %p66
      %p69 = scmp.ne.s32.totalorder %s54, %s68
      %p70 = scmp.eq.s32.totalorder %s23, 0
      %p71 = por %p69, %p70
      %s73 = sadd.s32 %s72, 1
      %p76 = scmp.eq.s32.totalorder %s17, 1
      %p77 = scmp.ne.s32.totalorder %s72, %s74
      %p78 = scmp.eq.s32.totalorder %s17, 0
      %p79 = por %p77, %p78
      %p80 = scmp.ne.s32.totalorder %s72, %s74
      %p81 = scmp.eq.s32.totalorder %s22, 1
      %p82 = por %p80, %p81
      %p83 = scmp.ne.s32.totalorder %s74, %s75
      %p84 = scmp.eq.s32.totalorder %s22, 0
      %p85 = por %p83, %p84
      %p86 = scmp.ne.s32.totalorder %s74, %s75
      %p87 = scmp.eq.s32.totalorder %s23, 1
      %p88 = por %p86, %p87
      %p90 = scmp.ne.s32.totalorder %s75, %s89
      %p91 = scmp.eq.s32.totalorder %s23, 0
      %p92 = por %p90, %p91
      %s94 = sadd.s32 %s93, 1
      %p97 = scmp.eq.s32.totalorder %s17, 1
      %p98 = scmp.ne.s32.totalorder %s93, %s95
      %p99 = scmp.eq.s32.totalorder %s17, 0
      %p100 = por %p98, %p99
      %p101 = scmp.ne.s32.totalorder %s93, %s95
      %p102 = scmp.eq.s32.totalorder %s22, 1
      %p103 = por %p101, %p102
      %p104 = scmp.ne.s32.totalorder %s95, %s96
      %p105 = scmp.eq.s32.totalorder %s22, 0
      %p106 = por %p104, %p105
      %p107 = scmp.ne.s32.totalorder %s95, %s96
      %p108 = scmp.eq.s32.totalorder %s23, 1
      %p109 = por %p107, %p108
      %p111 = scmp.ne.s32.totalorder %s96, %s110
      %p112 = scmp.eq.s32.totalorder %s23, 0
      %p113 = por %p111, %p112
      %s115 = sadd.s32 %s114, 1
      %p118 = scmp.eq.s32.totalorder %s17, 1
      %p119 = scmp.ne.s32.totalorder %s114, %s116
      %p120 = scmp.eq.s32.totalorder %s17, 0
      %p121 = por %p119, %p120
      %p122 = scmp.ne.s32.totalorder %s114, %s116
      %p123 = scmp.eq.s32.totalorder %s22, 1
      %p124 = por %p122, %p123
      %p125 = scmp.ne.s32.totalorder %s116, %s117
      %p126 = scmp.eq.s32.totalorder %s22, 0
      %p127 = por %p125, %p126
      %p128 = scmp.ne.s32.totalorder %s116, %s117
      %p129 = scmp.eq.s32.totalorder %s23, 1
      %p130 = por %p128, %p129
      %p132 = scmp.ne.s32.totalorder %s117, %s131
      %p133 = scmp.eq.s32.totalorder %s23, 0
      %p134 = por %p132, %p133
      %s135 = ssub.s32 %s17, %s24
      %p136 = scmp.eq.s32.totalorder %s135, 0
      %s138 = sadd.s32 %s137, 1
      %s139 = scalar_select %p136, %s137, %s138
      %p142 = pneg %p136
      %p143 = scmp.eq.s32.totalorder %s17, 1
      %p144 = por %p142, %p143
      %p145 = scmp.ne.s32.totalorder %s137, %s140
      %p146 = scmp.eq.s32.totalorder %s17, 0
      %p147 = por %p145, %p146
      %p148 = scmp.ne.s32.totalorder %s137, %s140
      %p149 = scmp.eq.s32.totalorder %s22, 1
      %p150 = por %p148, %p149
      %p151 = scmp.ne.s32.totalorder %s140, %s141
      %p152 = scmp.eq.s32.totalorder %s22, 0
      %p153 = por %p151, %p152
      %p154 = scmp.ne.s32.totalorder %s140, %s141
      %p155 = scmp.eq.s32.totalorder %s23, 1
      %p156 = por %p154, %p155
      %p158 = scmp.ne.s32.totalorder %s141, %s157
      %p159 = scmp.eq.s32.totalorder %s23, 0
      %p160 = por %p158, %p159
      %p161 = scmp.le.s32.totalorder 1, %s17
      %p162 = scmp.lt.s32.totalorder %s17, 3
      %p163 = pnand %p161, %p162
      %p164 = pneg %p163
      // Predicated region
      $region9: #{tpu_custom_call.1} parent=5 // pred_check
        _
      $region10: #{tpu_custom_call.1} parent=5 // pred_check_branch
        %166 = sbr.rel (%p163) target = $region12
      $region11: #{tpu_custom_call.1} parent=5 // pred_region
        %s167 = ssub.s32 %s17, 1
        // Predicated region
        $region13: #{tpu_custom_call.1} parent=11 // pred_check
          %p168 = pneg %p64
        $region14: #{tpu_custom_call.1} parent=11 // pred_check_branch
          %170 = sbr.rel (%p168) target = $region16
        $region15: #{tpu_custom_call.1} parent=11 // pred_region
          _
        $region16: #{tpu_custom_call.1} parent=11 // pred_fallthru
          _
        // Predicated region
        $region17: #{tpu_custom_call.1} parent=11 // pred_check
          %p171 = pneg %p85
        $region18: #{tpu_custom_call.1} parent=11 // pred_check_branch
          %173 = sbr.rel (%p171) target = $region20
        $region19: #{tpu_custom_call.1} parent=11 // pred_region
          _
        $region20: #{tpu_custom_call.1} parent=11 // pred_fallthru
          _
        // Predicated region
        $region21: #{tpu_custom_call.1} parent=11 // pred_check
          %p174 = pneg %p106
        $region22: #{tpu_custom_call.1} parent=11 // pred_check_branch
          %176 = sbr.rel (%p174) target = $region24
        $region23: #{tpu_custom_call.1} parent=11 // pred_region
          _
        $region24: #{tpu_custom_call.1} parent=11 // pred_fallthru
          _
        // Predicated region
        $region25: #{tpu_custom_call.1} parent=11 // pred_check
          %p177 = pneg %p127
        $region26: #{tpu_custom_call.1} parent=11 // pred_check_branch
          %179 = sbr.rel (%p177) target = $region28
        $region27: #{tpu_custom_call.1} parent=11 // pred_region
          _
        $region28: #{tpu_custom_call.1} parent=11 // pred_fallthru
          _
      $region12: #{tpu_custom_call.1} parent=5 // pred_fallthru
        _
      %p180 = scmp.lt.s32.totalorder %s17, 2
      // Predicated region
      $region29: #{tpu_custom_call.1} parent=5 // pred_check
        %p181 = pneg %p180
      $region30: #{tpu_custom_call.1} parent=5 // pred_check_branch
        %183 = sbr.rel (%p181) target = $region32
      $region31: #{tpu_custom_call.1} parent=5 // pred_region
        // Predicated region
        $region33: #{tpu_custom_call.1} parent=31 // pred_check
          %p184 = pneg %p37
        $region34: #{tpu_custom_call.1} parent=31 // pred_check_branch
          %186 = sbr.rel (%p184) target = $region36
        $region35: #{tpu_custom_call.1} parent=31 // pred_region
          %s187 = sand.u32 %s27, 1
          %s188 = scalar_lea.sflag [#allocation3], %s187
          %s189 = sand.u32 %s27, 1
          %s190 = smul.addr %s189, 128
          %s191 = scalar_lea.vmem [#allocation2], %s190
          %s193 = ssub.s32 2048, 2048
          %194 = vsyncadd %s188, %s193
          %s195 = smul.addr %s17, 16
          %s196 = smul.addr %s195, 128
          %s197 = scalar_lea.hbm %s0, %s196
          %s198 = sshll.u32 %s191, 4
          %s199 = int_to_ptr.vmem [resolvable:$true] %s198
          %204 = dma.hbm_to_vmem [thread:$0]  %s197, 2048, %s199, %s188, 256, 256, 16
        $region36: #{tpu_custom_call.1} parent=31 // pred_fallthru
          _
      $region32: #{tpu_custom_call.1} parent=5 // pred_fallthru
        _
      %p205 = scmp.le.s32.totalorder 1, %s17
      %p206 = scmp.lt.s32.totalorder %s17, 3
      %p207 = pnand %p205, %p206
      %p208 = pneg %p207
      // Predicated region
      $region37: #{tpu_custom_call.1} parent=5 // pred_check
        _
      $region38: #{tpu_custom_call.1} parent=5 // pred_check_branch
        %210 = sbr.rel (%p207) target = $region40
      $region39: #{tpu_custom_call.1} parent=5 // pred_region
        %s211 = ssub.s32 %s17, 1
        %s212 = sand.u32 %s30, 1
        %s213 = scalar_lea.sflag [#allocation3], %s212
        %s214 = sand.u32 %s30, 1
        %s215 = smul.addr %s214, 128
        %s216 = scalar_lea.vmem [#allocation2], %s215
        // Predicated region
        $region41: #{tpu_custom_call.1} parent=39 // pred_check
          %p217 = pneg %p43
        $region42: #{tpu_custom_call.1} parent=39 // pred_check_branch
          %219 = sbr.rel (%p217) target = $region44
        $region43: #{tpu_custom_call.1} parent=39 // pred_region
          %220 = dma.done %s213, 2048
        $region44: #{tpu_custom_call.1} parent=39 // pred_fallthru
          _
        %s221 = sand.u32 %s30, 1
        %s222 = scalar_lea.sflag [#allocation3], %s221
        %s223 = sand.u32 %s30, 1
        %s224 = smul.addr %s223, 128
        %s225 = scalar_lea.vmem [#allocation2], %s224
        %p226 = pneg %p43
        %p227 = pneg %p40
        %p228 = pneg %p64
        %p229 = pneg %p61
        %p230 = pneg %p85
        %p231 = pneg %p82
        %p232 = pneg %p106
        %p233 = pneg %p103
        %p234 = pneg %p127
        %p235 = pneg %p124
        %p236 = pneg %p153
        %p237 = pneg %p150
        %s238 = sand.u32 %s140, 1
        %s239 = scalar_lea.sflag [#allocation4], %s238
        %s240 = sand.u32 %s140, 1
        %s241 = smul.addr %s240, 128
        %s242 = scalar_lea.vmem [#allocation5], %s241
        %v243 = vld [vmem:[%s216] sm:$0xff]
        %v244 = vld [vmem:[%s216 + $0x8] sm:$0xff]
        %v245 = vld [vmem:[%s216 + $0x10] sm:$0xff]
        %v246 = vld [vmem:[%s216 + $0x18] sm:$0xff]
        %v247 = vld [vmem:[%s216 + $0x20] sm:$0xff]
        %v248 = vld [vmem:[%s216 + $0x28] sm:$0xff]
        %v249 = vld [vmem:[%s216 + $0x30] sm:$0xff]
        %v250 = vld [vmem:[%s216 + $0x38] sm:$0xff]
        %v251 = vld [vmem:[%s216 + $0x40] sm:$0xff]
        %v252 = vld [vmem:[%s216 + $0x48] sm:$0xff]
        %v253 = vld [vmem:[%s216 + $0x50] sm:$0xff]
        %v254 = vld [vmem:[%s216 + $0x58] sm:$0xff]
        %v255 = vld [vmem:[%s216 + $0x60] sm:$0xff]
        %v256 = vld [vmem:[%s216 + $0x68] sm:$0xff]
        %v257 = vld [vmem:[%s216 + $0x70] sm:$0xff]
        %v258 = vld [vmem:[%s216 + $0x78] sm:$0xff]
        %v259 = vadd.f32 %v243, %v244
        %260 = vadd.xlane.f32.xlu0 %v259
        %v261 = vpop.xlane.xlu0 %260
        %v262 = vadd.f32 %v245, %v246
        %263 = vadd.xlane.f32.xlu0 %v262
        %v264 = vpop.xlane.xlu0 %263
        %v265 = vadd.f32 %v247, %v248
        %266 = vadd.xlane.f32.xlu0 %v265
        %v267 = vpop.xlane.xlu0 %266
        %v268 = vadd.f32 %v249, %v250
        %269 = vadd.xlane.f32.xlu0 %v268
        %v270 = vpop.xlane.xlu0 %269
        %v271 = vadd.f32 %v251, %v252
        %272 = vadd.xlane.f32.xlu0 %v271
        %v273 = vpop.xlane.xlu0 %272
        %v274 = vadd.f32 %v253, %v254
        %275 = vadd.xlane.f32.xlu0 %v274
        %v276 = vpop.xlane.xlu0 %275
        %v277 = vadd.f32 %v255, %v256
        %278 = vadd.xlane.f32.xlu0 %v277
        %v279 = vpop.xlane.xlu0 %278
        %v280 = vadd.f32 %v257, %v258
        %281 = vadd.xlane.f32.xlu0 %v280
        %v282 = vpop.xlane.xlu0 %281
        %v283 = vadd.f32 %v261, 0.0
        %v284 = vadd.f32 %v264, 0.0
        %v285 = vadd.f32 %v267, 0.0
        %v286 = vadd.f32 %v270, 0.0
        %v287 = vadd.f32 %v273, 0.0
        %v288 = vadd.f32 %v276, 0.0
        %v289 = vadd.f32 %v279, 0.0
        %v290 = vadd.f32 %v282, 0.0
        %v291 = vmax.f32 %v243, %v244
        %292 = vmax.xlane.f32.xlu0 %v291
        %v293 = vpop.xlane.xlu0 %292
        %v294 = vmax.f32 %v245, %v246
        %295 = vmax.xlane.f32.xlu0 %v294
        %v296 = vpop.xlane.xlu0 %295
        %v297 = vmax.f32 %v247, %v248
        %298 = vmax.xlane.f32.xlu0 %v297
        %v299 = vpop.xlane.xlu0 %298
        %v300 = vmax.f32 %v249, %v250
        %301 = vmax.xlane.f32.xlu0 %v300
        %v302 = vpop.xlane.xlu0 %301
        %v303 = vmax.f32 %v251, %v252
        %304 = vmax.xlane.f32.xlu0 %v303
        %v305 = vpop.xlane.xlu0 %304
        %v306 = vmax.f32 %v253, %v254
        %307 = vmax.xlane.f32.xlu0 %v306
        %v308 = vpop.xlane.xlu0 %307
        %v309 = vmax.f32 %v255, %v256
        %310 = vmax.xlane.f32.xlu0 %v309
        %v311 = vpop.xlane.xlu0 %310
        %v312 = vmax.f32 %v257, %v258
        %313 = vmax.xlane.f32.xlu0 %v312
        %v314 = vpop.xlane.xlu0 %313
        %v315 = vmax.f32 %v293, -3.4028235e+38
        %v316 = vmax.f32 %v296, -3.4028235e+38
        %v317 = vmax.f32 %v299, -3.4028235e+38
        %v318 = vmax.f32 %v302, -3.4028235e+38
        %v319 = vmax.f32 %v305, -3.4028235e+38
        %v320 = vmax.f32 %v308, -3.4028235e+38
        %v321 = vmax.f32 %v311, -3.4028235e+38
        %v322 = vmax.f32 %v314, -3.4028235e+38
        %v323 = vmul.f32 %v283, 0.00390625
        %v324 = vmul.f32 %v284, 0.00390625
        %v325 = vmul.f32 %v285, 0.00390625
        %v326 = vmul.f32 %v286, 0.00390625
        %v327 = vmul.f32 %v287, 0.00390625
        %v328 = vmul.f32 %v288, 0.00390625
        %v329 = vmul.f32 %v289, 0.00390625
        %v330 = vmul.f32 %v290, 0.00390625
        %v331 = vld [vmem:[%s1] sm:$0xf]
        %v332 = vld [vmem:[%s2] sm:$0xf]
        %vm333 = vcmask 523264
        %v335 = vsel %vm333, %v331, 0
        %337 = vmatprep.subr.mxu0 0.0
        %338 = vmatpush1.msra.mxu0 0.0
        %339 = vmatprep.subr.mxu0 0.0
        %340 = vmatpush1.msra.mxu0 0.0
        %341 = vmatprep.subr.mxu0 0.0
        %342 = vmatpush1.msra.mxu0 0.0
        %343 = vmatprep.subr.mxu0 0.0
        %344 = vmatpush1.msra.mxu0 0.0
        %345 = vmatprep.subr.mxu0 0.0
        %346 = vmatpush1.msra.mxu0 0.0
        %347 = vmatprep.subr.mxu0 0.0
        %348 = vmatpush1.msra.mxu0 0.0
        %349 = vmatprep.subr.mxu0 0.0
        %350 = vmatpush1.msra.mxu0 0.0
        %351 = vmatprep.subr.mxu0 0.0
        %352 = vmatpush1.msra.mxu0 0.0
        %353 = vmatprep.subr.mxu0 0.0
        %354 = vmatpush1.msra.mxu0 %v330
        %355 = vmatprep.subr.mxu0 0.0
        %356 = vmatpush1.msra.mxu0 %v329
        %357 = vmatprep.subr.mxu0 0.0
        %358 = vmatpush1.msra.mxu0 %v328
        %359 = vmatprep.subr.mxu0 0.0
        %360 = vmatpush1.msra.mxu0 %v327
        %361 = vmatprep.subr.mxu0 0.0
        %362 = vmatpush1.msra.mxu0 %v326
        %363 = vmatprep.subr.mxu0 0.0
        %364 = vmatpush1.msra.mxu0 %v325
        %365 = vmatprep.subr.mxu0 0.0
        %366 = vmatpush1.msra.mxu0 %v324
        %367 = vmatprep.subr.mxu0 0.0
        %368 = vmatpush1.msra.mxu0 %v323
        %369 = vmatprep.subr.mxu0 0.0
        %370 = vmatpush2.msra.mxu0 0.0
        %371 = vmatprep.subr.mxu0 0.0
        %372 = vmatpush2.msra.mxu0 0.0
        %373 = vmatprep.subr.mxu0 0.0
        %374 = vmatpush2.msra.mxu0 0.0
        %375 = vmatprep.subr.mxu0 0.0
        %376 = vmatpush2.msra.mxu0 0.0
        %377 = vmatprep.subr.mxu0 0.0
        %378 = vmatpush2.msra.mxu0 0.0
        %379 = vmatprep.subr.mxu0 0.0
        %380 = vmatpush2.msra.mxu0 0.0
        %381 = vmatprep.subr.mxu0 0.0
        %382 = vmatpush2.msra.mxu0 0.0
        %383 = vmatprep.subr.mxu0 0.0
        %384 = vmatpush2.msra.mxu0 0.0
        %385 = vmatprep.subr.mxu0 0.0
        %386 = vmatpush2.msra.mxu0 0.0
        %387 = vmatprep.subr.mxu0 0.0
        %388 = vmatpush2.msra.mxu0 0.0
        %389 = vmatprep.subr.mxu0 0.0
        %390 = vmatpush2.msra.mxu0 0.0
        %391 = vmatprep.subr.mxu0 0.0
        %392 = vmatpush2.msra.mxu0 0.0
        %393 = vmatprep.subr.mxu0 0.0
        %394 = vmatpush2.msra.mxu0 0.0
        %395 = vmatprep.subr.mxu0 0.0
        %396 = vmatpush2.msra.mxu0 0.0
        %397 = vmatprep.subr.mxu0 0.0
        %398 = vmatpush2.msra.mxu0 0.0
        %399 = vmatprep.subr.mxu0 0.0
        %400 = vmatpush2.msra.mxu0 0.0
        %401 = vmatprep.mubr.f32.mxu0 0.0
        %402 = vmatmul.mubr.f32.gmra.mxu0 %v335
        %v403 = vpop.f32.mrf.mxu0
        %v404 = vadd.f32 %v332, %v403
        %v405 = vpop.f32.mrf.mxu0
        %406 = vdwg.mxu0
        %v407 = vmax.f32 %v404, 0.0
        %408 = vmatprep.subr.mxu0 0.0
        %409 = vmatpush1.msra.mxu0 0.0
        %410 = vmatprep.subr.mxu0 0.0
        %411 = vmatpush1.msra.mxu0 0.0
        %412 = vmatprep.subr.mxu0 0.0
        %413 = vmatpush1.msra.mxu0 0.0
        %414 = vmatprep.subr.mxu0 0.0
        %415 = vmatpush1.msra.mxu0 0.0
        %416 = vmatprep.subr.mxu0 0.0
        %417 = vmatpush1.msra.mxu0 0.0
        %418 = vmatprep.subr.mxu0 0.0
        %419 = vmatpush1.msra.mxu0 0.0
        %420 = vmatprep.subr.mxu0 0.0
        %421 = vmatpush1.msra.mxu0 0.0
        %422 = vmatprep.subr.mxu0 0.0
        %423 = vmatpush1.msra.mxu0 0.0
        %424 = vmatprep.subr.mxu0 0.0
        %425 = vmatpush1.msra.mxu0 %v322
        %426 = vmatprep.subr.mxu0 0.0
        %427 = vmatpush1.msra.mxu0 %v321
        %428 = vmatprep.subr.mxu0 0.0
        %429 = vmatpush1.msra.mxu0 %v320
        %430 = vmatprep.subr.mxu0 0.0
        %431 = vmatpush1.msra.mxu0 %v319
        %432 = vmatprep.subr.mxu0 0.0
        %433 = vmatpush1.msra.mxu0 %v318
        %434 = vmatprep.subr.mxu0 0.0
        %435 = vmatpush1.msra.mxu0 %v317
        %436 = vmatprep.subr.mxu0 0.0
        %437 = vmatpush1.msra.mxu0 %v316
        %438 = vmatprep.subr.mxu0 0.0
        %439 = vmatpush1.msra.mxu0 %v315
        %440 = vmatprep.subr.mxu0 0.0
        %441 = vmatpush2.msra.mxu0 0.0
        %442 = vmatprep.subr.mxu0 0.0
        %443 = vmatpush2.msra.mxu0 0.0
        %444 = vmatprep.subr.mxu0 0.0
        %445 = vmatpush2.msra.mxu0 0.0
        %446 = vmatprep.subr.mxu0 0.0
        %447 = vmatpush2.msra.mxu0 0.0
        %448 = vmatprep.subr.mxu0 0.0
        %449 = vmatpush2.msra.mxu0 0.0
        %450 = vmatprep.subr.mxu0 0.0
        %451 = vmatpush2.msra.mxu0 0.0
        %452 = vmatprep.subr.mxu0 0.0
        %453 = vmatpush2.msra.mxu0 0.0
        %454 = vmatprep.subr.mxu0 0.0
        %455 = vmatpush2.msra.mxu0 0.0
        %456 = vmatprep.subr.mxu0 0.0
        %457 = vmatpush2.msra.mxu0 0.0
        %458 = vmatprep.subr.mxu0 0.0
        %459 = vmatpush2.msra.mxu0 0.0
        %460 = vmatprep.subr.mxu0 0.0
        %461 = vmatpush2.msra.mxu0 0.0
        %462 = vmatprep.subr.mxu0 0.0
        %463 = vmatpush2.msra.mxu0 0.0
        %464 = vmatprep.subr.mxu0 0.0
        %465 = vmatpush2.msra.mxu0 0.0
        %466 = vmatprep.subr.mxu0 0.0
        %467 = vmatpush2.msra.mxu0 0.0
        %468 = vmatprep.subr.mxu0 0.0
        %469 = vmatpush2.msra.mxu0 0.0
        %470 = vmatprep.subr.mxu0 0.0
        %471 = vmatpush2.msra.mxu0 0.0
        %472 = vmatprep.mubr.f32.mxu0 0.0
        %473 = vmatmul.mubr.f32.gmra.mxu0 %v335
        %v474 = vpop.f32.mrf.mxu0
        %v475 = vadd.f32 %v332, %v474
        %v476 = vpop.f32.mrf.mxu0
        %477 = vdwg.mxu0
        %v478 = vmax.f32 %v475, 0.0
        %v479 = vld [vmem:[%s3] sm:$0xff]
        %v480 = vld [vmem:[%s3 + $0x8] sm:$0xff]
        %v481 = vld [vmem:[%s3 + $0x10] sm:$0xff]
        %v482 = vld [vmem:[%s3 + $0x18] sm:$0xff]
        %v483 = vld [vmem:[%s3 + $0x20] sm:$0xff]
        %v484 = vld [vmem:[%s3 + $0x28] sm:$0xff]
        %v485 = vld [vmem:[%s3 + $0x30] sm:$0xff]
        %v486 = vld [vmem:[%s3 + $0x38] sm:$0xff]
        %v487 = vadd.f32 %v407, %v478
        %v488 = vld [vmem:[%s4] sm:$0xff]
        %v489 = vld [vmem:[%s4 + $0x8] sm:$0xff]
        %v490 = vld [vmem:[%s4 + $0x10] sm:$0xff]
        %v491 = vld [vmem:[%s4 + $0x18] sm:$0xff]
        %v492 = vld [vmem:[%s4 + $0x20] sm:$0xff]
        %v493 = vld [vmem:[%s4 + $0x28] sm:$0xff]
        %v494 = vld [vmem:[%s4 + $0x30] sm:$0xff]
        %v495 = vld [vmem:[%s4 + $0x38] sm:$0xff]
        %v496 = vmul.f32 %v488, 2.0
        %v497 = vmul.f32 %v489, 2.0
        %v498 = vmul.f32 %v490, 2.0
        %v499 = vmul.f32 %v491, 2.0
        %v500 = vmul.f32 %v492, 2.0
        %v501 = vmul.f32 %v493, 2.0
        %v502 = vmul.f32 %v494, 2.0
        %v503 = vmul.f32 %v495, 2.0
        %vm504 = vcmask 31744
        %v506 = vsel %vm504, %v479, 0
        %v509 = vsel %vm504, %v480, 0
        %v512 = vsel %vm504, %v481, 0
        %v515 = vsel %vm504, %v482, 0
        %v518 = vsel %vm504, %v483, 0
        %v521 = vsel %vm504, %v484, 0
        %v524 = vsel %vm504, %v485, 0
        %v527 = vsel %vm504, %v486, 0
        %vm529 = vcmask 1043456
        %v531 = vsel %vm529, %v487, 0
        %533 = vmatprep.subr.mxu0 0.0
        %534 = vmatpush1.msra.mxu0 0.0
        %535 = vmatprep.subr.mxu0 0.0
        %536 = vmatpush1.msra.mxu0 0.0
        %537 = vmatprep.subr.mxu0 0.0
        %538 = vmatpush1.msra.mxu0 0.0
        %539 = vmatprep.subr.mxu0 0.0
        %540 = vmatpush1.msra.mxu0 0.0
        %541 = vmatprep.subr.mxu0 0.0
        %542 = vmatpush1.msra.mxu0 0.0
        %543 = vmatprep.subr.mxu0 0.0
        %544 = vmatpush1.msra.mxu0 0.0
        %545 = vmatprep.subr.mxu0 0.0
        %546 = vmatpush1.msra.mxu0 0.0
        %547 = vmatprep.subr.mxu0 0.0
        %548 = vmatpush1.msra.mxu0 0.0
        %549 = vmatprep.subr.mxu0 0.0
        %550 = vmatpush1.msra.mxu0 0.0
        %551 = vmatprep.subr.mxu0 0.0
        %552 = vmatpush1.msra.mxu0 0.0
        %553 = vmatprep.subr.mxu0 0.0
        %554 = vmatpush1.msra.mxu0 0.0
        %555 = vmatprep.subr.mxu0 0.0
        %556 = vmatpush1.msra.mxu0 0.0
        %557 = vmatprep.subr.mxu0 0.0
        %558 = vmatpush1.msra.mxu0 0.0
        %559 = vmatprep.subr.mxu0 0.0
        %560 = vmatpush1.msra.mxu0 0.0
        %561 = vmatprep.subr.mxu0 0.0
        %562 = vmatpush1.msra.mxu0 0.0
        %563 = vmatprep.subr.mxu0 0.0
        %564 = vmatpush1.msra.mxu0 %v531
        %565 = vmatprep.subr.mxu0 0.0
        %566 = vmatpush2.msra.mxu0 0.0
        %567 = vmatprep.subr.mxu0 0.0
        %568 = vmatpush2.msra.mxu0 0.0
        %569 = vmatprep.subr.mxu0 0.0
        %570 = vmatpush2.msra.mxu0 0.0
        %571 = vmatprep.subr.mxu0 0.0
        %572 = vmatpush2.msra.mxu0 0.0
        %573 = vmatprep.subr.mxu0 0.0
        %574 = vmatpush2.msra.mxu0 0.0
        %575 = vmatprep.subr.mxu0 0.0
        %576 = vmatpush2.msra.mxu0 0.0
        %577 = vmatprep.subr.mxu0 0.0
        %578 = vmatpush2.msra.mxu0 0.0
        %579 = vmatprep.subr.mxu0 0.0
        %580 = vmatpush2.msra.mxu0 0.0
        %581 = vmatprep.subr.mxu0 0.0
        %582 = vmatpush2.msra.mxu0 0.0
        %583 = vmatprep.subr.mxu0 0.0
        %584 = vmatpush2.msra.mxu0 0.0
        %585 = vmatprep.subr.mxu0 0.0
        %586 = vmatpush2.msra.mxu0 0.0
        %587 = vmatprep.subr.mxu0 0.0
        %588 = vmatpush2.msra.mxu0 0.0
        %589 = vmatprep.subr.mxu0 0.0
        %590 = vmatpush2.msra.mxu0 0.0
        %591 = vmatprep.subr.mxu0 0.0
        %592 = vmatpush2.msra.mxu0 0.0
        %593 = vmatprep.subr.mxu0 0.0
        %594 = vmatpush2.msra.mxu0 0.0
        %595 = vmatprep.subr.mxu0 0.0
        %596 = vmatpush2.msra.mxu0 0.0
        %597 = vmatprep.mubr.f32.mxu0 0.0
        %598 = vmatmul.mubr.f32.gmra.mxu0 %v506
        %v599 = vpop.f32.mrf.mxu0
        %v600 = vadd.f32 %v496, %v599
        %v601 = vpop.f32.mrf.mxu0
        %602 = vmatprep.mubr.f32.mxu0 0.0
        %603 = vmatmul.mubr.f32.gmra.mxu0 %v509
        %v604 = vpop.f32.mrf.mxu0
        %v605 = vadd.f32 %v497, %v604
        %v606 = vpop.f32.mrf.mxu0
        %607 = vmatprep.mubr.f32.mxu0 0.0
        %608 = vmatmul.mubr.f32.gmra.mxu0 %v512
        %v609 = vpop.f32.mrf.mxu0
        %v610 = vadd.f32 %v498, %v609
        %v611 = vpop.f32.mrf.mxu0
        %612 = vmatprep.mubr.f32.mxu0 0.0
        %613 = vmatmul.mubr.f32.gmra.mxu0 %v515
        %v614 = vpop.f32.mrf.mxu0
        %v615 = vadd.f32 %v499, %v614
        %v616 = vpop.f32.mrf.mxu0
        %617 = vmatprep.mubr.f32.mxu0 0.0
        %618 = vmatmul.mubr.f32.gmra.mxu0 %v518
        %v619 = vpop.f32.mrf.mxu0
        %v620 = vadd.f32 %v500, %v619
        %v621 = vpop.f32.mrf.mxu0
        %622 = vmatprep.mubr.f32.mxu0 0.0
        %623 = vmatmul.mubr.f32.gmra.mxu0 %v521
        %v624 = vpop.f32.mrf.mxu0
        %v625 = vadd.f32 %v501, %v624
        %v626 = vpop.f32.mrf.mxu0
        %627 = vmatprep.mubr.f32.mxu0 0.0
        %628 = vmatmul.mubr.f32.gmra.mxu0 %v524
        %v629 = vpop.f32.mrf.mxu0
        %v630 = vadd.f32 %v502, %v629
        %v631 = vpop.f32.mrf.mxu0
        %632 = vmatprep.mubr.f32.mxu0 0.0
        %633 = vmatmul.mubr.f32.gmra.mxu0 %v527
        %v634 = vpop.f32.mrf.mxu0
        %v635 = vadd.f32 %v503, %v634
        %v636 = vpop.f32.mrf.mxu0
        %637 = vdwg.mxu0
        %v638 = vxor.u32 %v600, 2147483648
        %v639 = vxor.u32 %v605, 2147483648
        %v640 = vxor.u32 %v610, 2147483648
        %v641 = vxor.u32 %v615, 2147483648
        %v642 = vxor.u32 %v620, 2147483648
        %v643 = vxor.u32 %v625, 2147483648
        %v644 = vxor.u32 %v630, 2147483648
        %v645 = vxor.u32 %v635, 2147483648
        %v646 = vmul.f32 %v638, 1.442695
        %v647 = vpow.pop %v646
        %v648 = vmul.f32 %v639, 1.442695
        %v649 = vpow.pop %v648
        %v650 = vmul.f32 %v640, 1.442695
        %v651 = vpow.pop %v650
        %v652 = vmul.f32 %v641, 1.442695
        %v653 = vpow.pop %v652
        %v654 = vmul.f32 %v642, 1.442695
        %v655 = vpow.pop %v654
        %v656 = vmul.f32 %v643, 1.442695
        %v657 = vpow.pop %v656
        %v658 = vmul.f32 %v644, 1.442695
        %v659 = vpow.pop %v658
        %v660 = vmul.f32 %v645, 1.442695
        %v661 = vpow.pop %v660
        %v662 = vadd.f32 %v647, 1.0
        %v663 = vadd.f32 %v649, 1.0
        %v664 = vadd.f32 %v651, 1.0
        %v665 = vadd.f32 %v653, 1.0
        %v666 = vadd.f32 %v655, 1.0
        %v667 = vadd.f32 %v657, 1.0
        %v668 = vadd.f32 %v659, 1.0
        %v669 = vadd.f32 %v661, 1.0
        %v670 = vrcp.pop %v662
        %v671 = vmul.f32 1.0, %v670
        %v672 = vrcp.pop %v663
        %v673 = vmul.f32 1.0, %v672
        %v674 = vrcp.pop %v664
        %v675 = vmul.f32 1.0, %v674
        %v676 = vrcp.pop %v665
        %v677 = vmul.f32 1.0, %v676
        %v678 = vrcp.pop %v666
        %v679 = vmul.f32 1.0, %v678
        %v680 = vrcp.pop %v667
        %v681 = vmul.f32 1.0, %v680
        %v682 = vrcp.pop %v668
        %v683 = vmul.f32 1.0, %v682
        %v684 = vrcp.pop %v669
        %v685 = vmul.f32 1.0, %v684
        %687 = vset.pattern.permute.xlu0 0
        %688 = vperm.xlu0 %687, %v671
        %v689 = vpop.permute.xlu0 %688
        %692 = vset.pattern.permute.xlu0 0
        %693 = vperm.xlu0 %692, %v673
        %v694 = vpop.permute.xlu0 %693
        %697 = vset.pattern.permute.xlu0 0
        %698 = vperm.xlu0 %697, %v675
        %v699 = vpop.permute.xlu0 %698
        %702 = vset.pattern.permute.xlu0 0
        %703 = vperm.xlu0 %702, %v677
        %v704 = vpop.permute.xlu0 %703
        %707 = vset.pattern.permute.xlu0 0
        %708 = vperm.xlu0 %707, %v679
        %v709 = vpop.permute.xlu0 %708
        %712 = vset.pattern.permute.xlu0 0
        %713 = vperm.xlu0 %712, %v681
        %v714 = vpop.permute.xlu0 %713
        %717 = vset.pattern.permute.xlu0 0
        %718 = vperm.xlu0 %717, %v683
        %v719 = vpop.permute.xlu0 %718
        %722 = vset.pattern.permute.xlu0 0
        %723 = vperm.xlu0 %722, %v685
        %v724 = vpop.permute.xlu0 %723
        %v726 = vmul.f32 %v243, %v689
        %v727 = vmul.f32 %v244, %v689
        %v728 = vmul.f32 %v245, %v694
        %v729 = vmul.f32 %v246, %v694
        %v730 = vmul.f32 %v247, %v699
        %v731 = vmul.f32 %v248, %v699
        %v732 = vmul.f32 %v249, %v704
        %v733 = vmul.f32 %v250, %v704
        %v734 = vmul.f32 %v251, %v709
        %v735 = vmul.f32 %v252, %v709
        %v736 = vmul.f32 %v253, %v714
        %v737 = vmul.f32 %v254, %v714
        %v738 = vmul.f32 %v255, %v719
        %v739 = vmul.f32 %v256, %v719
        %v740 = vmul.f32 %v257, %v724
        %v741 = vmul.f32 %v258, %v724
        %742 = vst [vmem:[%s242] sm:$0xff] %v726
        %743 = vst [vmem:[%s242 + $0x8] sm:$0xff] %v727
        %744 = vst [vmem:[%s242 + $0x10] sm:$0xff] %v728
        %745 = vst [vmem:[%s242 + $0x18] sm:$0xff] %v729
        %746 = vst [vmem:[%s242 + $0x20] sm:$0xff] %v730
        %747 = vst [vmem:[%s242 + $0x28] sm:$0xff] %v731
        %748 = vst [vmem:[%s242 + $0x30] sm:$0xff] %v732
        %749 = vst [vmem:[%s242 + $0x38] sm:$0xff] %v733
        %750 = vst [vmem:[%s242 + $0x40] sm:$0xff] %v734
        %751 = vst [vmem:[%s242 + $0x48] sm:$0xff] %v735
        %752 = vst [vmem:[%s242 + $0x50] sm:$0xff] %v736
        %753 = vst [vmem:[%s242 + $0x58] sm:$0xff] %v737
        %754 = vst [vmem:[%s242 + $0x60] sm:$0xff] %v738
        %755 = vst [vmem:[%s242 + $0x68] sm:$0xff] %v739
        %756 = vst [vmem:[%s242 + $0x70] sm:$0xff] %v740
        %757 = vst [vmem:[%s242 + $0x78] sm:$0xff] %v741
        %s758 = sand.u32 %s140, 1
        %s759 = scalar_lea.sflag [#allocation4], %s758
        %s760 = sand.u32 %s140, 1
        %s761 = smul.addr %s760, 128
        %s762 = scalar_lea.vmem [#allocation5], %s761
        // Predicated region
        $region45: #{tpu_custom_call.1} parent=39 // pred_check
          %p763 = pneg %p150
        $region46: #{tpu_custom_call.1} parent=39 // pred_check_branch
          %765 = sbr.rel (%p763) target = $region48
        $region47: #{tpu_custom_call.1} parent=39 // pred_region
          %s767 = ssub.s32 2048, 2048
          %768 = vsyncadd %s759, %s767
          %s769 = smul.addr %s22, 16
          %s770 = smul.addr %s769, 128
          %s771 = scalar_lea.hbm %s5, %s770
          %s772 = sshll.u32 %s762, 4
          %s773 = int_to_ptr.vmem [resolvable:$true] %s772
          %778 = dma.vmem_to_hbm [thread:$0]  %s773, 2048, %s771, %s759, 256, 256, 16
        $region48: #{tpu_custom_call.1} parent=39 // pred_fallthru
          _
      $region40: #{tpu_custom_call.1} parent=5 // pred_fallthru
        _
      %p779 = scmp.le.s32.totalorder 2, %s17
      // Predicated region
      $region49: #{tpu_custom_call.1} parent=5 // pred_check
        %p780 = pneg %p779
      $region50: #{tpu_custom_call.1} parent=5 // pred_check_branch
        %782 = sbr.rel (%p780) target = $region52
      $region51: #{tpu_custom_call.1} parent=5 // pred_region
        %s783 = ssub.s32 %s17, 2
        // Predicated region
        $region53: #{tpu_custom_call.1} parent=51 // pred_check
          %p784 = pneg %p156
        $region54: #{tpu_custom_call.1} parent=51 // pred_check_branch
          %786 = sbr.rel (%p784) target = $region56
        $region55: #{tpu_custom_call.1} parent=51 // pred_region
          %s787 = sand.u32 %s141, 1
          %s788 = scalar_lea.sflag [#allocation4], %s787
          %s789 = sand.u32 %s141, 1
          %s790 = smul.addr %s789, 128
          %s791 = scalar_lea.vmem [#allocation5], %s790
          %792 = dma.done %s788, 2048
        $region56: #{tpu_custom_call.1} parent=51 // pred_fallthru
          _
      $region52: #{tpu_custom_call.1} parent=5 // pred_fallthru
        _
    $region6: #{tpu_custom_call.1} parent=1 // loop_footer
      %s21 = sadd.s32 1, %s17
    $region7: #{tpu_custom_call.1} parent=1 // loop_footer_branch
      %16 = sbr.rel target = $region3
    $region8: #{tpu_custom_call.1} parent=1 // loop_exit
      _
    %793 = vsyncpa [#allocation3], 1
    %s794 = scalar_lea.sflag [#allocation3], 1
    %795 = vsyncpa %s794, 1
    %796 = vsyncpa [#allocation4], 1
    %s797 = scalar_lea.sflag [#allocation4], 1
    %798 = vsyncpa %s797, 1

</llo_original>
